<compile_context>
chip_gen: v5e
topology: v5e:2x2
jax: 0.10.0
libtpu: 0.0.40
codegen_flags: <defaults>
</compile_context>

<pallas_src>
import functools

import jax
import jax.numpy as jnp
from jax.experimental import pallas as pl
from jax.experimental.pallas import tpu as pltpu

EPS = 1e-5
_MiB = 1024 * 1024


def _round_up(x, m):
    return (x + m - 1) // m * m


def _cdiv(a, b):
    return (a + b - 1) // b


def _vmem_capacity_bytes():
    try:
        info = pltpu.get_tpu_info()
        cap = getattr(info, "vmem_capacity_bytes", None)
        if cap:
            return int(cap)
    except Exception:
        pass
    return 64 * _MiB  # conservative fallback (v7x per-core); v5e/v6e have 128 MiB


def _layer_norm_rows(x_f32, gamma, beta, single_pass):
    if single_pass:
        # One traversal: var = E[x^2] - mean^2 (small-D / VPU-bound regime).
        mean = jnp.mean(x_f32, axis=-1, keepdims=True)
        msq = jnp.mean(x_f32 * x_f32, axis=-1, keepdims=True)
        var = msq - mean * mean
        xc = x_f32 - mean
    else:
        mean = jnp.mean(x_f32, axis=-1, keepdims=True)
        xc = x_f32 - mean
        var = jnp.mean(xc * xc, axis=-1, keepdims=True)
    inv = jax.lax.rsqrt(var + EPS)
    return xc * inv * gamma + beta


def _fused_kernel(x_ref, gamma_ref, beta_ref, wt_ref, b_ref, o_ref, *, single_pass):
    # x_ref: (TR, D); gamma/beta: (1, D) f32; wt_ref: (D, TN); b_ref: (1, TN) f32.
    x = x_ref[...].astype(jnp.float32)                    # LN statistics in f32
    xn = _layer_norm_rows(x, gamma_ref[...], beta_ref[...], single_pass)
    y = jnp.dot(xn.astype(wt_ref.dtype), wt_ref[...],
                preferred_element_type=jnp.float32) + b_ref[...]
    # Dropout: identity in eval mode.
    # TODO(synk): training-mode dropout would use pltpu.prng_seed/prng_random_bits.
    o_ref[...] = jnp.maximum(y, 0.0).astype(o_ref.dtype)


def _fused_kernel_cached(x_ref, gamma_ref, beta_ref, wt_ref, b_ref, o_ref,
                         xn_ref, *, single_pass):
    # Rows-outer / cols-inner grid: LayerNorm (and the cast to the MXU dtype)
    # is computed once per row tile and cached for every weight-column tile.
    @pl.when(pl.program_id(1) == 0)
    def _():
        x = x_ref[...].astype(jnp.float32)
        xn = _layer_norm_rows(x, gamma_ref[...], beta_ref[...], single_pass)
        xn_ref[...] = xn.astype(xn_ref.dtype)

    y = jnp.dot(xn_ref[...], wt_ref[...],
                preferred_element_type=jnp.float32) + b_ref[...]
    o_ref[...] = jnp.maximum(y, 0.0).astype(o_ref.dtype)


def prepare_weight(weight, mxu_dtype=None):
    """One-time (parameter-load time) transpose/pack of the PyTorch (out, in) weight.

    mxu_dtype=jnp.bfloat16 is the recommended MXU operand dtype; doing this
    outside the per-call forward avoids a D x D HBM transpose/cast per step.
    """
    w_t = weight.T                                        # (in, out) so y = xn @ W^T
    if mxu_dtype is not None:
        w_t = w_t.astype(mxu_dtype)
    return w_t


def _vmem_estimate(tr, tn, D, x_bytes, w_bytes, out_bytes, n_col_tiles, cached):
    w_bufs = 1 if n_col_tiles == 1 else 2
    b_bufs = 1 if n_col_tiles == 1 else 2
    est = 0
    est += 2 * tr * D * x_bytes            # x tile, double-buffered
    est += 2 * tr * tn * out_bytes         # output tile, double-buffered
    est += w_bufs * D * tn * w_bytes       # W^T slab(s)
    est += 2 * 8 * D * 4                   # gamma + beta (sublane-padded f32)
    est += b_bufs * 8 * tn * 4             # bias slice(s)
    est += 2 * tr * D * 4                  # in-kernel f32 x / xn working set
    est += tr * tn * 4                     # f32 matmul accumulator
    if cached:
        est += tr * D * w_bytes            # LN-cache scratch (MXU dtype)
    return est


def _select_tiles(rows, D, x_bytes, w_bytes, out_bytes, tile_rows, tile_cols, vmem_cap):
    row_align = 8 if x_bytes >= 4 else 16
    budget = int(0.8 * vmem_cap)
    tr0 = _round_up(min(tile_rows, _round_up(rows, row_align)), row_align)

    if tile_cols is not None:
        tn = int(tile_cols)
        assert D % tn == 0 and tn % 128 == 0, \
            "tile_cols must divide dim and be a multiple of 128"
        return tr0, tn

    def fits(tr, tn):
        n_col = D // tn
        return _vmem_estimate(tr, tn, D, x_bytes, w_bytes, out_bytes,
                              n_col, n_col > 1) <= budget

    # Row-tile candidates: requested size, halved down to 256 (stay MXU-deep).
    tr_cands = []
    tr = tr0
    while tr >= row_align:
        tr_cands.append(tr)
        if tr <= 256:
            break
        tr = max(_round_up(tr // 2, row_align), row_align)

    # 1) Prefer the resident-weight path: weight HBM traffic is O(1).
    for tr in tr_cands:
        if fits(tr, D):
            return tr, D

    # 2) N-tile the weight columns; prefer wide, MXU-width-aligned slabs
    #    (>=256 keeps the 2x256x256 MXU full and output stores lane-dense).
    tn_cands = [t for t in (2048, 1024, 512, 256, 128) if t < D and D % t == 0]
    for tn in tn_cands:
        for tr in tr_cands:
            if fits(tr, tn):
                return tr, tn

    # 3) Last resort: smallest column slab, shrink rows until it fits.
    tn = tn_cands[-1] if tn_cands else D
    tr = tr_cands[-1]
    while tr > row_align and not fits(tr, tn):
        tr = max(_round_up(tr // 2, row_align), row_align)
    return tr, tn


def embedding_forward(x, gamma, beta, weight_t, bias, *,
                      tile_rows=512, tile_cols=None, grid_order="auto"):
    """Fused LayerNorm(dim) -> Linear(dim, dim) -> (Dropout: identity) -> ReLU.

    x:         (B, S, D)
    weight_t:  (D, D) pre-transposed (in, out) weight from prepare_weight()
    grid_order: "auto" | "rows_outer" | "cols_outer" (only matters when N-tiled)
    Returns (B, S, D) in x.dtype.
    """
    B, S, D = x.shape
    rows = B * S
    assert weight_t.shape == (D, D)

    x_bytes = jnp.dtype(x.dtype).itemsize
    w_bytes = jnp.dtype(weight_t.dtype).itemsize
    out_bytes = x_bytes

    vmem_cap = _vmem_capacity_bytes()
    tr, tn = _select_tiles(rows, D, x_bytes, w_bytes, out_bytes,
                           tile_rows, tile_cols, vmem_cap)
    n_row_tiles = _cdiv(rows, tr)     # ragged last tile is bounds-masked by Pallas
    n_col_tiles = D // tn

    # No padding copy and no output slice: Pallas clips the edge-tile DMAs.
    x2d = x.reshape(rows, D)
    gamma2 = gamma.reshape(1, D).astype(jnp.float32)
    beta2 = beta.reshape(1, D).astype(jnp.float32)
    bias2 = bias.reshape(1, D).astype(jnp.float32)

    single_pass = D <= 512            # fused LN statistics only where VPU-bound
    const_buf = pl.Buffered(buffer_count=1)

    # --- choose the execution mode -------------------------------------------
    if n_col_tiles == 1:
        mode = "resident"
    elif n_row_tiles == 1:
        # Decode-like shapes: keep both grid axes 'parallel' so v7x's second
        # TensorCore can shard the column axis; LN recompute is negligible.
        mode = "rows_outer_nocache"
    else:
        if grid_order == "auto":
            w_restream = D * D * w_bytes * n_row_tiles      # rows-outer weight traffic
            x_restream = rows * D * x_bytes * n_col_tiles   # cols-outer x traffic
            # 2x margin: rows-outer also wins the LayerNorm cache.
            use_cols_outer = w_restream > 2 * x_restream
        else:
            use_cols_outer = (grid_order == "cols_outer")
        mode = "cols_outer" if use_cols_outer else "rows_outer_cached"

    cached = (mode == "rows_outer_cached")
    est = _vmem_estimate(tr, tn, D, x_bytes, w_bytes, out_bytes, n_col_tiles, cached)
    vmem_limit = int(min(max(est * 1.15, 16 * _MiB), 0.9 * vmem_cap))

    kernel = functools.partial(_fused_kernel, single_pass=single_pass)
    scratch_shapes = ()

    if mode == "resident":
        grid = (n_row_tiles,)
        in_specs = [
            pl.BlockSpec((tr, D), lambda i: (i, 0)),                           # x rows
            pl.BlockSpec((1, D), lambda i: (0, 0), pipeline_mode=const_buf),   # gamma
            pl.BlockSpec((1, D), lambda i: (0, 0), pipeline_mode=const_buf),   # beta
            pl.BlockSpec((D, D), lambda i: (0, 0), pipeline_mode=const_buf),   # W^T
            pl.BlockSpec((1, D), lambda i: (0, 0), pipeline_mode=const_buf),   # bias
        ]
        out_spec = pl.BlockSpec((tr, D), lambda i: (i, 0))
        dims = ("parallel",)
    elif mode in ("rows_outer_cached", "rows_outer_nocache"):
        grid = (n_row_tiles, n_col_tiles)
        in_specs = [
            pl.BlockSpec((tr, D), lambda i, j: (i, 0)),                        # x (resident over j)
            pl.BlockSpec((1, D), lambda i, j: (0, 0), pipeline_mode=const_buf),
            pl.BlockSpec((1, D), lambda i, j: (0, 0), pipeline_mode=const_buf),
            pl.BlockSpec((D, tn), lambda i, j: (0, j)),                        # W^T cols stream
            pl.BlockSpec((1, tn), lambda i, j: (0, j)),                        # bias slice
        ]
        out_spec = pl.BlockSpec((tr, tn), lambda i, j: (i, j))
        if cached:
            kernel = functools.partial(_fused_kernel_cached, single_pass=single_pass)
            scratch_shapes = (pltpu.VMEM((tr, D), weight_t.dtype),)
            dims = ("parallel", "arbitrary")   # sequential col axis keeps the LN cache valid
        else:
            dims = ("parallel", "parallel")
    else:  # cols_outer: W^T slab resident across the inner row sweep, x streams
        grid = (n_col_tiles, n_row_tiles)
        in_specs = [
            pl.BlockSpec((tr, D), lambda j, i: (i, 0)),
            pl.BlockSpec((1, D), lambda j, i: (0, 0), pipeline_mode=const_buf),
            pl.BlockSpec((1, D), lambda j, i: (0, 0), pipeline_mode=const_buf),
            pl.BlockSpec((D, tn), lambda j, i: (0, j)),                        # resident over i
            pl.BlockSpec((1, tn), lambda j, i: (0, j)),
        ]
        out_spec = pl.BlockSpec((tr, tn), lambda j, i: (i, j))
        dims = ("parallel", "parallel")

    out2d = pl.pallas_call(
        kernel,
        out_shape=jax.ShapeDtypeStruct((rows, D), x.dtype),
        grid_spec=pltpu.PrefetchScalarGridSpec(
            num_scalar_prefetch=0,
            grid=grid,
            in_specs=in_specs,
            out_specs=out_spec,
            scratch_shapes=scratch_shapes,
        ),
        compiler_params=pltpu.CompilerParams(
            dimension_semantics=dims,
            vmem_limit_bytes=vmem_limit),
    )(x2d, gamma2, beta2, weight_t, bias2)

    return out2d.reshape(B, S, D)


def _reference(x, gamma, beta, weight, bias):
    xf = x.astype(jnp.float32)
    mean = xf.mean(-1, keepdims=True)
    var = ((xf - mean) ** 2).mean(-1, keepdims=True)
    xn = (xf - mean) / jnp.sqrt(var + EPS) * gamma + beta
    return jnp.maximum(xn @ weight.T + bias, 0.0)


if __name__ == "__main__":
    key = jax.random.PRNGKey(0)
    (kx, kw, kb, kg, kbeta, kx2,
     kw2, kb2, kg2, kbeta2, kx3, kx4) = jax.random.split(key, 12)

    # ---- small hidden dim: resident-weight path ------------------------------
    D = 128
    gamma = jnp.ones((D,), jnp.float32) + 0.01 * jax.random.normal(kg, (D,), jnp.float32)
    beta = 0.01 * jax.random.normal(kbeta, (D,), jnp.float32)
    bound = 1.0 / (D ** 0.5)
    weight = jax.random.uniform(kw, (D, D), jnp.float32, minval=-bound, maxval=bound)
    bias = jax.random.uniform(kb, (D,), jnp.float32, minval=-bound, maxval=bound)
    wt_f32 = prepare_weight(weight)                           # once, at param-load time
    wt_bf16 = prepare_weight(weight, mxu_dtype=jnp.bfloat16)

    x = jax.random.normal(kx, (2, 8, D), dtype=jnp.float32)
    ref = _reference(x, gamma, beta, weight, bias)

    out = embedding_forward(x, gamma, beta, wt_f32, bias)
    jax.block_until_ready(out)
    assert jnp.allclose(out, ref, atol=1e-4, rtol=1e-4), "resident f32 path mismatch"

    out_bf16 = embedding_forward(x, gamma, beta, wt_bf16, bias)
    jax.block_until_ready(out_bf16)
    assert jnp.allclose(out_bf16, ref, atol=2e-2, rtol=2e-2), "resident bf16 path mismatch"

    # Ragged row count: grid = cdiv(rows, tr); Pallas masks the last tile writeback.
    x_r = jax.random.normal(kx2, (2, 5, D), dtype=jnp.float32)
    out_r = embedding_forward(x_r, gamma, beta, wt_f32, bias, tile_rows=8)
    jax.block_until_ready(out_r)
    assert jnp.allclose(out_r, _reference(x_r, gamma, beta, weight, bias),
                        atol=1e-4, rtol=1e-4), "ragged/masked path mismatch"

    # ---- larger hidden dim: exercise the N-tiled (weight-column) paths --------
    D2 = 256
    gamma_b = jnp.ones((D2,), jnp.float32) + 0.01 * jax.random.normal(kg2, (D2,), jnp.float32)
    beta_b = 0.01 * jax.random.normal(kbeta2, (D2,), jnp.float32)
    bound2 = 1.0 / (D2 ** 0.5)
    weight_b = jax.random.uniform(kw2, (D2, D2), jnp.float32, minval=-bound2, maxval=bound2)
    bias_b = jax.random.uniform(kb2, (D2,), jnp.float32, minval=-bound2, maxval=bound2)
    wt_b = prepare_weight(weight_b)

    x2 = jax.random.normal(kx3, (2, 12, D2), dtype=jnp.float32)
    ref2 = _reference(x2, gamma_b, beta_b, weight_b, bias_b)

    # rows-outer / cols-inner with the LayerNorm cache (col axis 'arbitrary')
    out_cached = embedding_forward(x2, gamma_b, beta_b, wt_b, bias_b,
                                   tile_rows=8, tile_cols=128, grid_order="rows_outer")
    jax.block_until_ready(out_cached)
    assert jnp.allclose(out_cached, ref2, atol=1e-4, rtol=1e-4), "N-tiled cached path mismatch"

    # cols-outer / rows-inner (W^T slab resident across the inner row sweep)
    out_colsout = embedding_forward(x2, gamma_b, beta_b, wt_b, bias_b,
                                    tile_rows=8, tile_cols=128, grid_order="cols_outer")
    jax.block_until_ready(out_colsout)
    assert jnp.allclose(out_colsout, ref2, atol=1e-4, rtol=1e-4), "cols-outer path mismatch"

    # single row tile + N-tiled columns (decode-like): both grid axes 'parallel'
    x3 = jax.random.normal(kx4, (1, 4, D2), dtype=jnp.float32)
    out_dec = embedding_forward(x3, gamma_b, beta_b, wt_b, bias_b, tile_cols=128)
    jax.block_until_ready(out_dec)
    assert jnp.allclose(out_dec, _reference(x3, gamma_b, beta_b, weight_b, bias_b),
                        atol=1e-4, rtol=1e-4), "decode-shape N-tiled path mismatch"

    print("KERNEL_OK")
</pallas_src>

<mosaic_0001>
module attributes {stable_mosaic.version = 11 : i64} {
  func.func @_fused_kernel(%arg0: i32, %arg1: memref<16x128xf32, #tpu.memory_space<vmem>>, %arg2: memref<1x128xf32, #tpu.memory_space<vmem>>, %arg3: memref<1x128xf32, #tpu.memory_space<vmem>>, %arg4: memref<128x128xf32, #tpu.memory_space<vmem>>, %arg5: memref<1x128xf32, #tpu.memory_space<vmem>>, %arg6: memref<16x128xf32, #tpu.memory_space<vmem>>) attributes {dimension_semantics = [#tpu.dimension_semantics<parallel>], iteration_bounds = array<i64: 1>, scalar_prefetch = 0 : i64, scratch_operands = 0 : i64, tpu.core_type = #tpu.core_type<tc>, window_params = [{transform_indices = @transform_0, window_bounds = array<i64: 16, 128>}, {pipeline_mode = #tpu.pipeline_mode<synchronous>, transform_indices = @transform_1, window_bounds = array<i64: 1, 128>}, {pipeline_mode = #tpu.pipeline_mode<synchronous>, transform_indices = @transform_2, window_bounds = array<i64: 1, 128>}, {pipeline_mode = #tpu.pipeline_mode<synchronous>, transform_indices = @transform_3, window_bounds = array<i64: 128, 128>}, {pipeline_mode = #tpu.pipeline_mode<synchronous>, transform_indices = @transform_4, window_bounds = array<i64: 1, 128>}, {transform_indices = @transform_5, window_bounds = array<i64: 16, 128>}]} {
    %c0 = arith.constant 0 : index
    %c0_0 = arith.constant 0 : index
    %0 = vector.load %arg1[%c0, %c0_0] : memref<16x128xf32, #tpu.memory_space<vmem>>, vector<16x128xf32>
    %c0_1 = arith.constant 0 : index
    %c0_2 = arith.constant 0 : index
    %1 = vector.load %arg2[%c0_1, %c0_2] : memref<1x128xf32, #tpu.memory_space<vmem>>, vector<1x128xf32>
    %c0_3 = arith.constant 0 : index
    %c0_4 = arith.constant 0 : index
    %2 = vector.load %arg3[%c0_3, %c0_4] : memref<1x128xf32, #tpu.memory_space<vmem>>, vector<1x128xf32>
    %cst = arith.constant dense<0.000000e+00> : vector<16xf32>
    %3 = vector.multi_reduction <add>, %0, %cst [1] : vector<16x128xf32> to vector<16xf32>
    %4 = vector.shape_cast %3 : vector<16xf32> to vector<16x1xf32>
    %cst_5 = arith.constant 1.280000e+02 : f32
    %5 = vector.broadcast %cst_5 : f32 to vector<16x1xf32>
    %6 = arith.divf %4, %5 : vector<16x1xf32>
    %7 = arith.mulf %0, %0 : vector<16x128xf32>
    %cst_6 = arith.constant dense<0.000000e+00> : vector<16xf32>
    %8 = vector.multi_reduction <add>, %7, %cst_6 [1] : vector<16x128xf32> to vector<16xf32>
    %9 = vector.shape_cast %8 : vector<16xf32> to vector<16x1xf32>
    %cst_7 = arith.constant 1.280000e+02 : f32
    %10 = vector.broadcast %cst_7 : f32 to vector<16x1xf32>
    %11 = arith.divf %9, %10 : vector<16x1xf32>
    %12 = arith.mulf %6, %6 : vector<16x1xf32>
    %13 = arith.subf %11, %12 : vector<16x1xf32>
    %14 = vector.broadcast %6 : vector<16x1xf32> to vector<16x128xf32>
    %15 = arith.subf %0, %14 : vector<16x128xf32>
    %cst_8 = arith.constant 9.99999974E-6 : f32
    %16 = vector.broadcast %cst_8 : f32 to vector<16x1xf32>
    %17 = arith.addf %13, %16 : vector<16x1xf32>
    %18 = math.rsqrt %17 : vector<16x1xf32>
    %19 = vector.broadcast %18 : vector<16x1xf32> to vector<16x128xf32>
    %20 = arith.mulf %15, %19 : vector<16x128xf32>
    %21 = vector.broadcast %1 : vector<1x128xf32> to vector<16x128xf32>
    %22 = arith.mulf %20, %21 : vector<16x128xf32>
    %23 = vector.broadcast %2 : vector<1x128xf32> to vector<16x128xf32>
    %24 = arith.addf %22, %23 : vector<16x128xf32>
    %c0_9 = arith.constant 0 : index
    %c0_10 = arith.constant 0 : index
    %25 = vector.load %arg4[%c0_9, %c0_10] : memref<128x128xf32, #tpu.memory_space<vmem>>, vector<128x128xf32>
    %cst_11 = arith.constant dense<0.000000e+00> : vector<16x128xf32>
    %26 = tpu.matmul %24, %25, %cst_11 {dimension_numbers = #tpu.dot_dimension_numbers<[1], [0], [0], [1], [0, 0, 1, 1], [], []>} : vector<16x128xf32>, vector<128x128xf32>, vector<16x128xf32> -> vector<16x128xf32>
    %c0_12 = arith.constant 0 : index
    %c0_13 = arith.constant 0 : index
    %27 = vector.load %arg5[%c0_12, %c0_13] : memref<1x128xf32, #tpu.memory_space<vmem>>, vector<1x128xf32>
    %28 = vector.broadcast %27 : vector<1x128xf32> to vector<16x128xf32>
    %29 = arith.addf %26, %28 : vector<16x128xf32>
    %cst_14 = arith.constant 0.000000e+00 : f32
    %30 = vector.broadcast %cst_14 : f32 to vector<16x128xf32>
    %31 = arith.maximumf %29, %30 : vector<16x128xf32>
    %c0_15 = arith.constant 0 : index
    %c0_16 = arith.constant 0 : index
    %32 = vector.load %arg6[%c0_15, %c0_16] : memref<16x128xf32, #tpu.memory_space<vmem>>, vector<16x128xf32>
    tpu.vector_store %arg6[%c0_15, %c0_16], %31 {strides = array<i32>} : memref<16x128xf32, #tpu.memory_space<vmem>>, vector<16x128xf32>,
    return
  }
  func.func @transform_0(%arg0: i32) -> (i32, i32) {
    %c0_i32 = arith.constant 0 : i32
    %c0_i32_0 = arith.constant 0 : i32
    return %arg0, %c0_i32 : i32, i32
  }
  func.func @transform_1(%arg0: i32) -> (i32, i32) {
    %c0_i32 = arith.constant 0 : i32
    %c0_i32_0 = arith.constant 0 : i32
    %c0_i32_1 = arith.constant 0 : i32
    return %c0_i32, %c0_i32_0 : i32, i32
  }
  func.func @transform_2(%arg0: i32) -> (i32, i32) {
    %c0_i32 = arith.constant 0 : i32
    %c0_i32_0 = arith.constant 0 : i32
    %c0_i32_1 = arith.constant 0 : i32
    return %c0_i32, %c0_i32_0 : i32, i32
  }
  func.func @transform_3(%arg0: i32) -> (i32, i32) {
    %c0_i32 = arith.constant 0 : i32
    %c0_i32_0 = arith.constant 0 : i32
    %c0_i32_1 = arith.constant 0 : i32
    return %c0_i32, %c0_i32_0 : i32, i32
  }
  func.func @transform_4(%arg0: i32) -> (i32, i32) {
    %c0_i32 = arith.constant 0 : i32
    %c0_i32_0 = arith.constant 0 : i32
    %c0_i32_1 = arith.constant 0 : i32
    return %c0_i32, %c0_i32_0 : i32, i32
  }
  func.func @transform_5(%arg0: i32) -> (i32, i32) {
    %c0_i32 = arith.constant 0 : i32
    %c0_i32_0 = arith.constant 0 : i32
    return %arg0, %c0_i32 : i32, i32
  }
}

</mosaic_0001>

<llo_original>
// kernel: tpu_custom_call.1
$region0: #{tpu_custom_call.1}
  #allocation0 [shape = 'u32[]', space=smem, size = 0x4, offset = 0x4, fixed_abs, tag = 'smem constant byte address 0x4 - core index']
  #allocation1 [shape = 'u32[72,128]{1,0:T(1,128)}', space=vmem, size = 0x9000, scoped, tag = 'internal scratch']
  %s0 = inlined_call_operand.hbm [shape: f32[16,128], index: 0, kind: input, shape index: {}]
  %s1 = inlined_call_operand.hbm [shape: f32[1,128], index: 1, kind: input, shape index: {}]
  %s2 = inlined_call_operand.vmem [shape: f32[1,128], index: 2, kind: input, shape index: {}]
  %s3 = inlined_call_operand.hbm [shape: f32[128,128], index: 3, kind: input, shape index: {}]
  %s4 = inlined_call_operand.vmem [shape: f32[1,128], index: 4, kind: input, shape index: {}]
  %s5 = inlined_call_operand.hbm [shape: f32[16,128], index: 5, kind: output, shape index: {}]
  %s6 = sld [smem:[#allocation0]]
  $region42: #{tpu_custom_call.1} parent=0
    _
  %s8 = ssub.s32 1, %s6
  %s9 = scalar_select 0, %s8, %s6
  $region1: #{tpu_custom_call.1} parent=0
    #allocation2 [shape = 'u8[8192]{0}', space=vmem, size = 0x2000, scoped, tag = 'input window, operand 0, single buffered']
    #allocation3 [shape = 's32[1]{0}', space=sflag, size = 0x4, scoped, tag = 'scoped memory for tpu_custom_call.1']
    #allocation4 [shape = 's32[1]{0}', space=sflag, size = 0x4, scoped, tag = 'scoped memory for tpu_custom_call.1']
    #allocation5 [shape = 'u8[512]{0}', space=vmem, size = 0x400, scoped, tag = 'input window, operand 1, single buffered']
    #allocation6 [shape = 's32[1]{0}', space=sflag, size = 0x4, scoped, tag = 'scoped memory for tpu_custom_call.1']
    #allocation7 [shape = 'u8[65536]{0}', space=vmem, size = 0x10000, scoped, tag = 'input window, operand 3, single buffered']
    #allocation8 [shape = 'u8[8192]{0}', space=vmem, size = 0x2000, scoped, tag = 'output window, operand 0, single buffered']
    %10 = vsyncpa [#allocation3], 0
    %11 = vsyncpa [#allocation6], 0
    %12 = vsyncpa [#allocation4], 0
    // Predicated region
    $region2: #{tpu_custom_call.1} parent=1 // pred_check
      _
    $region3: #{tpu_custom_call.1} parent=1 // pred_check_branch
      %14 = sbr.rel (0) target = $region5
    $region4: #{tpu_custom_call.1} parent=1 // pred_region
      %16 = vsyncadd [#allocation3], 0
      %s17 = sshll.u32 %s0, 4
      %s18 = int_to_ptr.hbm [resolvable:$true] %s17
      %s19 = sshll.u32 [#allocation2], 4
      %s20 = int_to_ptr.vmem [resolvable:$true] %s19
      %25 = dma.hbm_to_vmem [thread:$0]  %s18, 256, %s20, [#allocation3], 128, 128, 8
    $region5: #{tpu_custom_call.1} parent=1 // pred_fallthru
      _
    // Predicated region
    $region6: #{tpu_custom_call.1} parent=1 // pred_check
      _
    $region7: #{tpu_custom_call.1} parent=1 // pred_check_branch
      %27 = sbr.rel (0) target = $region9
    $region8: #{tpu_custom_call.1} parent=1 // pred_region
      %29 = vsyncadd [#allocation6], 0
      %s31 = sshll.u32 %s1, 4
      %s32 = int_to_ptr.hbm [resolvable:$true] %s31
      %s33 = sshll.u32 [#allocation5], 4
      %s34 = int_to_ptr.vmem [resolvable:$true] %s33
      %36 = dma.hbm_to_vmem [thread:$0]  %s32, 16, %s34, [#allocation6]
    $region9: #{tpu_custom_call.1} parent=1 // pred_fallthru
      _
    // Predicated region
    $region10: #{tpu_custom_call.1} parent=1 // pred_check
      _
    $region11: #{tpu_custom_call.1} parent=1 // pred_check_branch
      %38 = sbr.rel (0) target = $region13
    $region12: #{tpu_custom_call.1} parent=1 // pred_region
      _
    $region13: #{tpu_custom_call.1} parent=1 // pred_fallthru
      _
    // Predicated region
    $region14: #{tpu_custom_call.1} parent=1 // pred_check
      _
    $region15: #{tpu_custom_call.1} parent=1 // pred_check_branch
      %40 = sbr.rel (0) target = $region17
    $region16: #{tpu_custom_call.1} parent=1 // pred_region
      %42 = vsyncadd [#allocation6], 0
      %s43 = sshll.u32 %s3, 4
      %s44 = int_to_ptr.hbm [resolvable:$true] %s43
      %s45 = sshll.u32 [#allocation7], 4
      %s46 = int_to_ptr.vmem [resolvable:$true] %s45
      %51 = dma.hbm_to_vmem [thread:$0]  %s44, 2048, %s46, [#allocation6], 128, 128, 8
    $region17: #{tpu_custom_call.1} parent=1 // pred_fallthru
      _
    // Predicated region
    $region18: #{tpu_custom_call.1} parent=1 // pred_check
      _
    $region19: #{tpu_custom_call.1} parent=1 // pred_check_branch
      %53 = sbr.rel (0) target = $region21
    $region20: #{tpu_custom_call.1} parent=1 // pred_region
      _
    $region21: #{tpu_custom_call.1} parent=1 // pred_fallthru
      _
    // Predicated region
    $region22: #{tpu_custom_call.1} parent=1 // pred_check
      _
    $region23: #{tpu_custom_call.1} parent=1 // pred_check_branch
      %55 = sbr.rel (0) target = $region25
    $region24: #{tpu_custom_call.1} parent=1 // pred_region
      %57 = dma.done [#allocation3], 256
    $region25: #{tpu_custom_call.1} parent=1 // pred_fallthru
      _
    // Predicated region
    $region26: #{tpu_custom_call.1} parent=1 // pred_check
      _
    $region27: #{tpu_custom_call.1} parent=1 // pred_check_branch
      %59 = sbr.rel (0) target = $region29
    $region28: #{tpu_custom_call.1} parent=1 // pred_region
      %61 = dma.done [#allocation6], 16
    $region29: #{tpu_custom_call.1} parent=1 // pred_fallthru
      _
    // Predicated region
    $region30: #{tpu_custom_call.1} parent=1 // pred_check
      _
    $region31: #{tpu_custom_call.1} parent=1 // pred_check_branch
      %63 = sbr.rel (0) target = $region33
    $region32: #{tpu_custom_call.1} parent=1 // pred_region
      %65 = dma.done [#allocation6], 2048
    $region33: #{tpu_custom_call.1} parent=1 // pred_fallthru
      _
    %v66 = vld [vmem:[#allocation2] sm:$0xff]
    %v67 = vld [vmem:[#allocation2 + $0x8] sm:$0xff]
    %v68 = vld [vmem:[#allocation5] sm:$0x1]
    %v69 = vld [vmem:[%s2] sm:$0x1]
    %70 = vadd.xlane.f32.xlu0 %v66
    %v71 = vpop.xlane.xlu0 %70
    %72 = vadd.xlane.f32.xlu0 %v67
    %v73 = vpop.xlane.xlu0 %72
    %v74 = vrcp.pop 128.0
    %v75 = vmul.f32 128.0, %v74
    %v76 = vsub.f32 1.0, %v75
    %v77 = vmul.f32 %v74, %v76
    %v78 = vadd.f32 %v74, %v77
    %vm79 = vweird.f32 %v74
    %v80 = vsel %vm79, %v74, %v78
    %v81 = vmul.f32 %v71, %v80
    %v82 = vmul.f32 %v73, %v80
    %v83 = vmul.f32 %v66, %v66
    %v84 = vmul.f32 %v67, %v67
    %85 = vadd.xlane.f32.xlu0 %v83
    %v86 = vpop.xlane.xlu0 %85
    %87 = vadd.xlane.f32.xlu0 %v84
    %v88 = vpop.xlane.xlu0 %87
    %v89 = vmul.f32 %v86, %v80
    %v90 = vmul.f32 %v88, %v80
    %v91 = vmul.f32 %v81, %v81
    %v92 = vmul.f32 %v82, %v82
    %v93 = vsub.f32 %v89, %v91
    %v94 = vsub.f32 %v90, %v92
    %v95 = vsub.f32 %v66, %v81
    %v96 = vsub.f32 %v67, %v82
    %v97 = vadd.f32 %v93, 1e-05
    %v98 = vadd.f32 %v94, 1e-05
    %v99 = vrsqrt.pop %v97
    %v100 = vmul.f32 %v99, %v97
    %v101 = vmul.f32 %v100, %v99
    %v102 = vmul.f32 0.5, %v101
    %v103 = vsub.f32 1.5, %v102
    %v104 = vmul.f32 %v99, %v103
    %vm105 = vweird.f32 %v97
    %vm106 = vweird.f32 %v99
    %vm107 = vmor %vm105, %vm106
    %v108 = vsel %vm107, %v99, %v104
    %v109 = vrsqrt.pop %v98
    %v110 = vmul.f32 %v109, %v98
    %v111 = vmul.f32 %v110, %v109
    %v112 = vmul.f32 0.5, %v111
    %v113 = vsub.f32 1.5, %v112
    %v114 = vmul.f32 %v109, %v113
    %vm115 = vweird.f32 %v98
    %vm116 = vweird.f32 %v109
    %vm117 = vmor %vm115, %vm116
    %v118 = vsel %vm117, %v109, %v114
    %v119 = vmul.f32 %v95, %v108
    %v120 = vmul.f32 %v96, %v118
    %v122 = vperm.slane %v68, 0
    %v124 = vmul.f32 %v119, %v122
    %v125 = vmul.f32 %v120, %v122
    %v127 = vperm.slane %v69, 0
    %v129 = vadd.f32 %v124, %v127
    %v130 = vadd.f32 %v125, %v127
    %v131 = vld [vmem:[#allocation7] sm:$0xff]
    %v132 = vld [vmem:[#allocation7 + $0x8] sm:$0xff]
    %v133 = vld [vmem:[#allocation7 + $0x10] sm:$0xff]
    %v134 = vld [vmem:[#allocation7 + $0x18] sm:$0xff]
    %v135 = vld [vmem:[#allocation7 + $0x20] sm:$0xff]
    %v136 = vld [vmem:[#allocation7 + $0x28] sm:$0xff]
    %v137 = vld [vmem:[#allocation7 + $0x30] sm:$0xff]
    %v138 = vld [vmem:[#allocation7 + $0x38] sm:$0xff]
    %v139 = vld [vmem:[#allocation7 + $0x40] sm:$0xff]
    %v140 = vld [vmem:[#allocation7 + $0x48] sm:$0xff]
    %v141 = vld [vmem:[#allocation7 + $0x50] sm:$0xff]
    %v142 = vld [vmem:[#allocation7 + $0x58] sm:$0xff]
    %v143 = vld [vmem:[#allocation7 + $0x60] sm:$0xff]
    %v144 = vld [vmem:[#allocation7 + $0x68] sm:$0xff]
    %v145 = vld [vmem:[#allocation7 + $0x70] sm:$0xff]
    %v146 = vld [vmem:[#allocation7 + $0x78] sm:$0xff]
    %v147 = vld [vmem:[%s4] sm:$0x1]
    %v149 = vperm.slane %v147, 0
    %151 = vmatpush.msra.mxu0 %v146
    %152 = vmatpush.msra.mxu0 %v145
    %153 = vmatpush.msra.mxu0 %v144
    %154 = vmatpush.msra.mxu0 %v143
    %155 = vmatpush.msra.mxu0 %v142
    %156 = vmatpush.msra.mxu0 %v141
    %157 = vmatpush.msra.mxu0 %v140
    %158 = vmatpush.msra.mxu0 %v139
    %159 = vmatpush.msra.mxu0 %v138
    %160 = vmatpush.msra.mxu0 %v137
    %161 = vmatpush.msra.mxu0 %v136
    %162 = vmatpush.msra.mxu0 %v135
    %163 = vmatpush.msra.mxu0 %v134
    %164 = vmatpush.msra.mxu0 %v133
    %165 = vmatpush.msra.mxu0 %v132
    %166 = vmatpush.msra.mxu0 %v131
    %167 = vmatmul.f32.gmra.mxu0 %v129
    %v168 = vpop.f32.mrf.mxu0
    %v169 = vadd.f32 %v149, %v168
    %170 = vmatmul.f32.gmra.mxu0 %v130
    %v171 = vpop.f32.mrf.mxu0
    %v172 = vadd.f32 %v149, %v171
    %173 = vdwg.mxu0
    %v174 = vmax.f32 %v169, 0.0
    %v175 = vmax.f32 %v172, 0.0
    %176 = vst [vmem:[#allocation8] sm:$0xff] %v174
    %177 = vst [vmem:[#allocation8 + $0x8] sm:$0xff] %v175
    // Predicated region
    $region34: #{tpu_custom_call.1} parent=1 // pred_check
      _
    $region35: #{tpu_custom_call.1} parent=1 // pred_check_branch
      %179 = sbr.rel (0) target = $region37
    $region36: #{tpu_custom_call.1} parent=1 // pred_region
      %181 = vsyncadd [#allocation4], 0
      %s182 = sshll.u32 [#allocation8], 4
      %s183 = int_to_ptr.vmem [resolvable:$true] %s182
      %s184 = sshll.u32 %s5, 4
      %s185 = int_to_ptr.hbm [resolvable:$true] %s184
      %190 = dma.vmem_to_hbm [thread:$0]  %s183, 256, %s185, [#allocation4], 128, 128, 8
    $region37: #{tpu_custom_call.1} parent=1 // pred_fallthru
      _
    // Predicated region
    $region38: #{tpu_custom_call.1} parent=1 // pred_check
      _
    $region39: #{tpu_custom_call.1} parent=1 // pred_check_branch
      %192 = sbr.rel (0) target = $region41
    $region40: #{tpu_custom_call.1} parent=1 // pred_region
      %194 = dma.done [#allocation4], 256
    $region41: #{tpu_custom_call.1} parent=1 // pred_fallthru
      _
    %195 = vsyncpa [#allocation3], 1
    %196 = vsyncpa [#allocation6], 1
    %197 = vsyncpa [#allocation4], 1

</llo_original>
